<compile_context>
chip_gen: v5e
topology: v5e:2x2
jax: 0.10.0
libtpu: 0.0.40
codegen_flags: <defaults>
</compile_context>

<pallas_src>
import jax
import jax.numpy as jnp
from jax.experimental import pallas as pl
from jax.experimental.pallas import tpu as pltpu


def stockpred_kernel(x_ref,
                     w1_ref, b1_ref,
                     w2_ref, b2_ref,
                     w3_ref, b3_ref,
                     w4_ref, b4_ref,
                     o_ref):
    # In-kernel cast of the input tile (avoids a separate XLA cast pass of x
    # through HBM in the wrapper). MXU dots accumulate in f32.
    x = x_ref[...].astype(w1_ref.dtype)
    act_dtype = b1_ref.dtype  # f32 on v5e, bf16 on v6e/v7x (set in prepare_params)

    # layer 1 + tanh   (dropout -> identity in eval mode)
    h = jnp.dot(x, w1_ref[...], preferred_element_type=jnp.float32)
    h = jnp.tanh(h.astype(act_dtype) + b1_ref[...])
    # layer 2 + tanh
    h = jnp.dot(h.astype(w2_ref.dtype), w2_ref[...],
                preferred_element_type=jnp.float32)
    h = jnp.tanh(h.astype(act_dtype) + b2_ref[...])
    # layer 3 + tanh
    h = jnp.dot(h.astype(w3_ref.dtype), w3_ref[...],
                preferred_element_type=jnp.float32)
    h = jnp.tanh(h.astype(act_dtype) + b3_ref[...])
    # layer 4 (no activation); bias add in f32, store in the output dtype.
    out = (jnp.dot(h.astype(w4_ref.dtype), w4_ref[...],
                   preferred_element_type=jnp.float32)
           + b4_ref[...])
    o_ref[...] = out.astype(o_ref.dtype)


def _round_up(n, m):
    return ((n + m - 1) // m) * m


def _choose_batch_tile(B):
    """Large, aligned batch tiles; multiple pipelined steps for big batches."""
    if B <= 256:
        return _round_up(B, 8)       # tiny batch: single sublane-aligned step
    if B <= 1024:
        return 256                   # >= 2 grid steps
    # Aim for 4096-16384 rows/step with ~8 pipelined steps; 16384 cap keeps
    # the double-buffered working set (~20 MB) inside v7x's per-core VMEM.
    return int(min(16384, max(512, _round_up(B // 8, 256))))


def _default_bf16_activations():
    """bf16 EUP/VPU exists on v6e/v7x; keep activations f32 on v5e."""
    try:
        kind = jax.devices()[0].device_kind.lower()
        return "v5" not in kind
    except Exception:
        return True


def prepare_params(params, *, use_bf16=True, bf16_activations=None):
    """One-time weight/bias preparation (hoisted out of the per-forward path).

    Weights are stored transposed (in_features, out_features); biases (1, out).
    """
    if bf16_activations is None:
        bf16_activations = use_bf16 and _default_bf16_activations()
    mxu_dtype = jnp.bfloat16 if use_bf16 else jnp.float32
    act_dtype = jnp.bfloat16 if (use_bf16 and bf16_activations) else jnp.float32
    return {
        "w1": params["w1"].astype(mxu_dtype),
        "w2": params["w2"].astype(mxu_dtype),
        "w3": params["w3"].astype(mxu_dtype),
        "w4": params["w4"].astype(mxu_dtype),
        "b1": params["b1"].astype(act_dtype),
        "b2": params["b2"].astype(act_dtype),
        "b3": params["b3"].astype(act_dtype),
        "b4": params["b4"].astype(jnp.float32),   # final bias add stays f32
    }


def stockpred_forward(x, prep, *, batch_tile=None, out_dtype=None):
    """Run the fused MLP.  x: (B, input_size) f32.  prep: prepare_params() output."""
    B, IN = x.shape
    OUT = prep["w4"].shape[1]
    if out_dtype is None:
        out_dtype = prep["w1"].dtype   # emit in compute dtype; caller casts if needed

    if batch_tile is None:
        batch_tile = _choose_batch_tile(B)
    batch_tile = max(8, _round_up(int(batch_tile), 8))

    # Pad ragged batches to a tile multiple (sliced back below). No dtype cast
    # here: the bf16 cast of x happens inside the kernel.
    Bp = _round_up(B, batch_tile)
    xp = x if Bp == B else jnp.pad(x, ((0, Bp - B), (0, 0)))

    grid = (Bp // batch_tile,)

    def full(a):
        # Grid-invariant whole-array block: resident VMEM operand across steps.
        return pl.BlockSpec(a.shape, lambda i: (0, 0))

    out = pl.pallas_call(
        stockpred_kernel,
        out_shape=jax.ShapeDtypeStruct((Bp, OUT), out_dtype),
        grid_spec=pltpu.PrefetchScalarGridSpec(
            num_scalar_prefetch=0,
            grid=grid,
            in_specs=[
                pl.BlockSpec((batch_tile, IN), lambda i: (i, 0)),
                full(prep["w1"]), full(prep["b1"]),
                full(prep["w2"]), full(prep["b2"]),
                full(prep["w3"]), full(prep["b3"]),
                full(prep["w4"]), full(prep["b4"]),
            ],
            # Lane-narrow (OUT=8) but unpadded output block: masked vst per
            # step, ~6x less HBM writeback than padding to 128 lanes.
            out_specs=pl.BlockSpec((batch_tile, OUT), lambda i: (i, 0)),
        ),
        compiler_params=pltpu.CompilerParams(
            dimension_semantics=("parallel",),
            # Raised to cover the 16384-row tiles; still within v7x's 64 MiB
            # per-core VMEM and well above v5e's 16 MiB scoped default.
            vmem_limit_bytes=48 * 1024 * 1024),
    )(xp, prep["w1"], prep["b1"], prep["w2"], prep["b2"],
      prep["w3"], prep["b3"], prep["w4"], prep["b4"])

    return out[:B] if Bp != B else out


def init_params(key, input_size, hidden_size_1, hidden_size_2,
                shrink_size, output_size):
    """Deterministic init mimicking nn.Linear default (uniform +-1/sqrt(fan_in)).

    Weights stored transposed: (in_features, out_features); biases (1, out).
    """
    dims = [(input_size, hidden_size_1),
            (hidden_size_1, hidden_size_2),
            (hidden_size_2, shrink_size),
            (shrink_size, output_size)]
    params = {}
    for idx, (fan_in, fan_out) in enumerate(dims, start=1):
        key, kw, kb = jax.random.split(key, 3)
        bound = 1.0 / jnp.sqrt(fan_in)
        params[f"w{idx}"] = jax.random.uniform(
            kw, (fan_in, fan_out), jnp.float32, -bound, bound)
        params[f"b{idx}"] = jax.random.uniform(
            kb, (1, fan_out), jnp.float32, -bound, bound)
    return params


def reference_forward(x, params):
    h = jnp.tanh(x @ params["w1"] + params["b1"])
    h = jnp.tanh(h @ params["w2"] + params["b2"])
    h = jnp.tanh(h @ params["w3"] + params["b3"])
    return h @ params["w4"] + params["b4"]


if __name__ == "__main__":
    # small shapes consistent with the module:
    #   input_size=32, hidden_size_1=64, hidden_size_2=32,
    #   shrink_size=16, output_size=8, batch=8
    B, IN, H1, H2, SH, OUT = 8, 32, 64, 32, 16, 8

    key = jax.random.PRNGKey(0)
    key, kx = jax.random.split(key)
    x = jax.random.normal(kx, (B, IN), jnp.float32)
    params = init_params(key, IN, H1, H2, SH, OUT)

    ref = reference_forward(x, params)

    # Default bf16 MXU path (bf16 activations on v6e/v7x): loose tolerance.
    prep_bf16 = prepare_params(params, use_bf16=True)
    out_bf16 = jax.block_until_ready(stockpred_forward(x, prep_bf16))
    assert out_bf16.shape == (B, OUT)
    assert jnp.allclose(out_bf16.astype(jnp.float32), ref, atol=1e-1, rtol=1e-1)

    # Pure f32 path: tight tolerance against the f32 reference.
    prep_f32 = prepare_params(params, use_bf16=False)
    out_f32 = jax.block_until_ready(stockpred_forward(x, prep_f32))
    assert out_f32.shape == (B, OUT)
    assert out_f32.dtype == jnp.float32
    assert jnp.allclose(out_f32, ref, atol=1e-5, rtol=1e-5)

    print("KERNEL_OK")
</pallas_src>

<mosaic_0001>
module attributes {stable_mosaic.version = 11 : i64} {
  func.func @stockpred_kernel(%arg0: i32, %arg1: memref<8x32xf32, #tpu.memory_space<vmem>>, %arg2: memref<32x64xbf16, #tpu.memory_space<vmem>>, %arg3: memref<1x64xbf16, #tpu.memory_space<vmem>>, %arg4: memref<64x32xbf16, #tpu.memory_space<vmem>>, %arg5: memref<1x32xbf16, #tpu.memory_space<vmem>>, %arg6: memref<32x16xbf16, #tpu.memory_space<vmem>>, %arg7: memref<1x16xbf16, #tpu.memory_space<vmem>>, %arg8: memref<16x8xbf16, #tpu.memory_space<vmem>>, %arg9: memref<1x8xf32, #tpu.memory_space<vmem>>, %arg10: memref<8x8xbf16, #tpu.memory_space<vmem>>) attributes {dimension_semantics = [#tpu.dimension_semantics<parallel>], iteration_bounds = array<i64: 1>, scalar_prefetch = 0 : i64, scratch_operands = 0 : i64, tpu.core_type = #tpu.core_type<tc>, window_params = [{transform_indices = @transform_0, window_bounds = array<i64: 8, 32>}, {pipeline_mode = #tpu.pipeline_mode<synchronous>, transform_indices = @transform_1, window_bounds = array<i64: 32, 64>}, {pipeline_mode = #tpu.pipeline_mode<synchronous>, transform_indices = @transform_2, window_bounds = array<i64: 1, 64>}, {pipeline_mode = #tpu.pipeline_mode<synchronous>, transform_indices = @transform_3, window_bounds = array<i64: 64, 32>}, {pipeline_mode = #tpu.pipeline_mode<synchronous>, transform_indices = @transform_4, window_bounds = array<i64: 1, 32>}, {pipeline_mode = #tpu.pipeline_mode<synchronous>, transform_indices = @transform_5, window_bounds = array<i64: 32, 16>}, {pipeline_mode = #tpu.pipeline_mode<synchronous>, transform_indices = @transform_6, window_bounds = array<i64: 1, 16>}, {pipeline_mode = #tpu.pipeline_mode<synchronous>, transform_indices = @transform_7, window_bounds = array<i64: 16, 8>}, {pipeline_mode = #tpu.pipeline_mode<synchronous>, transform_indices = @transform_8, window_bounds = array<i64: 1, 8>}, {transform_indices = @transform_9, window_bounds = array<i64: 8, 8>}]} {
    %c0 = arith.constant 0 : index
    %c0_0 = arith.constant 0 : index
    %0 = vector.load %arg1[%c0, %c0_0] : memref<8x32xf32, #tpu.memory_space<vmem>>, vector<8x32xf32>
    %1 = arith.truncf %0 : vector<8x32xf32> to vector<8x32xbf16>
    %c0_1 = arith.constant 0 : index
    %c0_2 = arith.constant 0 : index
    %2 = vector.load %arg2[%c0_1, %c0_2] : memref<32x64xbf16, #tpu.memory_space<vmem>>, vector<32x64xbf16>
    %cst = arith.constant dense<0.000000e+00> : vector<8x64xf32>
    %3 = tpu.matmul %1, %2, %cst {dimension_numbers = #tpu.dot_dimension_numbers<[1], [0], [0], [1], [0, 0, 1, 1], [], []>} : vector<8x32xbf16>, vector<32x64xbf16>, vector<8x64xf32> -> vector<8x64xf32>
    %4 = arith.truncf %3 : vector<8x64xf32> to vector<8x64xbf16>
    %c0_3 = arith.constant 0 : index
    %c0_4 = arith.constant 0 : index
    %5 = vector.load %arg3[%c0_3, %c0_4] : memref<1x64xbf16, #tpu.memory_space<vmem>>, vector<1x64xbf16>
    %6 = vector.broadcast %5 : vector<1x64xbf16> to vector<8x64xbf16>
    %7 = arith.addf %4, %6 : vector<8x64xbf16>
    %8 = math.tanh %7 : vector<8x64xbf16>
    %c0_5 = arith.constant 0 : index
    %c0_6 = arith.constant 0 : index
    %9 = vector.load %arg4[%c0_5, %c0_6] : memref<64x32xbf16, #tpu.memory_space<vmem>>, vector<64x32xbf16>
    %cst_7 = arith.constant dense<0.000000e+00> : vector<8x32xf32>
    %10 = tpu.matmul %8, %9, %cst_7 {dimension_numbers = #tpu.dot_dimension_numbers<[1], [0], [0], [1], [0, 0, 1, 1], [], []>} : vector<8x64xbf16>, vector<64x32xbf16>, vector<8x32xf32> -> vector<8x32xf32>
    %11 = arith.truncf %10 : vector<8x32xf32> to vector<8x32xbf16>
    %c0_8 = arith.constant 0 : index
    %c0_9 = arith.constant 0 : index
    %12 = vector.load %arg5[%c0_8, %c0_9] : memref<1x32xbf16, #tpu.memory_space<vmem>>, vector<1x32xbf16>
    %13 = vector.broadcast %12 : vector<1x32xbf16> to vector<8x32xbf16>
    %14 = arith.addf %11, %13 : vector<8x32xbf16>
    %15 = math.tanh %14 : vector<8x32xbf16>
    %c0_10 = arith.constant 0 : index
    %c0_11 = arith.constant 0 : index
    %16 = vector.load %arg6[%c0_10, %c0_11] : memref<32x16xbf16, #tpu.memory_space<vmem>>, vector<32x16xbf16>
    %cst_12 = arith.constant dense<0.000000e+00> : vector<8x16xf32>
    %17 = tpu.matmul %15, %16, %cst_12 {dimension_numbers = #tpu.dot_dimension_numbers<[1], [0], [0], [1], [0, 0, 1, 1], [], []>} : vector<8x32xbf16>, vector<32x16xbf16>, vector<8x16xf32> -> vector<8x16xf32>
    %18 = arith.truncf %17 : vector<8x16xf32> to vector<8x16xbf16>
    %c0_13 = arith.constant 0 : index
    %c0_14 = arith.constant 0 : index
    %19 = vector.load %arg7[%c0_13, %c0_14] : memref<1x16xbf16, #tpu.memory_space<vmem>>, vector<1x16xbf16>
    %20 = vector.broadcast %19 : vector<1x16xbf16> to vector<8x16xbf16>
    %21 = arith.addf %18, %20 : vector<8x16xbf16>
    %22 = math.tanh %21 : vector<8x16xbf16>
    %c0_15 = arith.constant 0 : index
    %c0_16 = arith.constant 0 : index
    %23 = vector.load %arg8[%c0_15, %c0_16] : memref<16x8xbf16, #tpu.memory_space<vmem>>, vector<16x8xbf16>
    %cst_17 = arith.constant dense<0.000000e+00> : vector<8x8xf32>
    %24 = tpu.matmul %22, %23, %cst_17 {dimension_numbers = #tpu.dot_dimension_numbers<[1], [0], [0], [1], [0, 0, 1, 1], [], []>} : vector<8x16xbf16>, vector<16x8xbf16>, vector<8x8xf32> -> vector<8x8xf32>
    %c0_18 = arith.constant 0 : index
    %c0_19 = arith.constant 0 : index
    %25 = vector.load %arg9[%c0_18, %c0_19] : memref<1x8xf32, #tpu.memory_space<vmem>>, vector<1x8xf32>
    %26 = vector.broadcast %25 : vector<1x8xf32> to vector<8x8xf32>
    %27 = arith.addf %24, %26 : vector<8x8xf32>
    %28 = arith.truncf %27 : vector<8x8xf32> to vector<8x8xbf16>
    %c0_20 = arith.constant 0 : index
    %c0_21 = arith.constant 0 : index
    %29 = vector.load %arg10[%c0_20, %c0_21] : memref<8x8xbf16, #tpu.memory_space<vmem>>, vector<8x8xbf16>
    tpu.vector_store %arg10[%c0_20, %c0_21], %28 {strides = array<i32>} : memref<8x8xbf16, #tpu.memory_space<vmem>>, vector<8x8xbf16>,
    return
  }
  func.func @transform_0(%arg0: i32) -> (i32, i32) {
    %c0_i32 = arith.constant 0 : i32
    %c0_i32_0 = arith.constant 0 : i32
    return %arg0, %c0_i32 : i32, i32
  }
  func.func @transform_1(%arg0: i32) -> (i32, i32) {
    %c0_i32 = arith.constant 0 : i32
    %c0_i32_0 = arith.constant 0 : i32
    %c0_i32_1 = arith.constant 0 : i32
    return %c0_i32, %c0_i32_0 : i32, i32
  }
  func.func @transform_2(%arg0: i32) -> (i32, i32) {
    %c0_i32 = arith.constant 0 : i32
    %c0_i32_0 = arith.constant 0 : i32
    %c0_i32_1 = arith.constant 0 : i32
    return %c0_i32, %c0_i32_0 : i32, i32
  }
  func.func @transform_3(%arg0: i32) -> (i32, i32) {
    %c0_i32 = arith.constant 0 : i32
    %c0_i32_0 = arith.constant 0 : i32
    %c0_i32_1 = arith.constant 0 : i32
    return %c0_i32, %c0_i32_0 : i32, i32
  }
  func.func @transform_4(%arg0: i32) -> (i32, i32) {
    %c0_i32 = arith.constant 0 : i32
    %c0_i32_0 = arith.constant 0 : i32
    %c0_i32_1 = arith.constant 0 : i32
    return %c0_i32, %c0_i32_0 : i32, i32
  }
  func.func @transform_5(%arg0: i32) -> (i32, i32) {
    %c0_i32 = arith.constant 0 : i32
    %c0_i32_0 = arith.constant 0 : i32
    %c0_i32_1 = arith.constant 0 : i32
    return %c0_i32, %c0_i32_0 : i32, i32
  }
  func.func @transform_6(%arg0: i32) -> (i32, i32) {
    %c0_i32 = arith.constant 0 : i32
    %c0_i32_0 = arith.constant 0 : i32
    %c0_i32_1 = arith.constant 0 : i32
    return %c0_i32, %c0_i32_0 : i32, i32
  }
  func.func @transform_7(%arg0: i32) -> (i32, i32) {
    %c0_i32 = arith.constant 0 : i32
    %c0_i32_0 = arith.constant 0 : i32
    %c0_i32_1 = arith.constant 0 : i32
    return %c0_i32, %c0_i32_0 : i32, i32
  }
  func.func @transform_8(%arg0: i32) -> (i32, i32) {
    %c0_i32 = arith.constant 0 : i32
    %c0_i32_0 = arith.constant 0 : i32
    %c0_i32_1 = arith.constant 0 : i32
    return %c0_i32, %c0_i32_0 : i32, i32
  }
  func.func @transform_9(%arg0: i32) -> (i32, i32) {
    %c0_i32 = arith.constant 0 : i32
    %c0_i32_0 = arith.constant 0 : i32
    return %arg0, %c0_i32 : i32, i32
  }
}

</mosaic_0001>

<llo_original>
// kernel: tpu_custom_call.1
$region0: #{tpu_custom_call.1}
  #allocation0 [shape = 'u32[]', space=smem, size = 0x4, offset = 0x4, fixed_abs, tag = 'smem constant byte address 0x4 - core index']
  #allocation1 [shape = 'u32[72,128]{1,0:T(1,128)}', space=vmem, size = 0x9000, scoped, tag = 'internal scratch']
  %s0 = inlined_call_operand.vmem [shape: f32[8,32], index: 0, kind: input, shape index: {}]
  %s1 = inlined_call_operand.vmem [shape: bf16[32,64], index: 1, kind: input, shape index: {}]
  %s2 = inlined_call_operand.vmem [shape: bf16[1,64], index: 2, kind: input, shape index: {}]
  %s3 = inlined_call_operand.vmem [shape: bf16[64,32], index: 3, kind: input, shape index: {}]
  %s4 = inlined_call_operand.vmem [shape: bf16[1,32], index: 4, kind: input, shape index: {}]
  %s5 = inlined_call_operand.vmem [shape: bf16[32,16], index: 5, kind: input, shape index: {}]
  %s6 = inlined_call_operand.vmem [shape: bf16[1,16], index: 6, kind: input, shape index: {}]
  %s7 = inlined_call_operand.vmem [shape: bf16[16,8], index: 7, kind: input, shape index: {}]
  %s8 = inlined_call_operand.vmem [shape: f32[1,8], index: 8, kind: input, shape index: {}]
  %s9 = inlined_call_operand.hbm [shape: bf16[8,8], index: 9, kind: output, shape index: {}]
  %s10 = sld [smem:[#allocation0]]
  $region46: #{tpu_custom_call.1} parent=0
    _
  %s12 = ssub.s32 1, %s10
  %s13 = scalar_select 0, %s12, %s10
  $region1: #{tpu_custom_call.1} parent=0
    #allocation2 [shape = 'u8[2048]{0}', space=vmem, size = 0x800, scoped, tag = 'output window, operand 0, single buffered']
    #allocation3 [shape = 's32[1]{0}', space=sflag, size = 0x4, scoped, tag = 'scoped memory for tpu_custom_call.1']
    %14 = vsyncpa [#allocation3], 0
    // Predicated region
    $region2: #{tpu_custom_call.1} parent=1 // pred_check
      _
    $region3: #{tpu_custom_call.1} parent=1 // pred_check_branch
      %16 = sbr.rel (0) target = $region5
    $region4: #{tpu_custom_call.1} parent=1 // pred_region
      _
    $region5: #{tpu_custom_call.1} parent=1 // pred_fallthru
      _
    // Predicated region
    $region6: #{tpu_custom_call.1} parent=1 // pred_check
      _
    $region7: #{tpu_custom_call.1} parent=1 // pred_check_branch
      %18 = sbr.rel (0) target = $region9
    $region8: #{tpu_custom_call.1} parent=1 // pred_region
      _
    $region9: #{tpu_custom_call.1} parent=1 // pred_fallthru
      _
    // Predicated region
    $region10: #{tpu_custom_call.1} parent=1 // pred_check
      _
    $region11: #{tpu_custom_call.1} parent=1 // pred_check_branch
      %20 = sbr.rel (0) target = $region13
    $region12: #{tpu_custom_call.1} parent=1 // pred_region
      _
    $region13: #{tpu_custom_call.1} parent=1 // pred_fallthru
      _
    // Predicated region
    $region14: #{tpu_custom_call.1} parent=1 // pred_check
      _
    $region15: #{tpu_custom_call.1} parent=1 // pred_check_branch
      %22 = sbr.rel (0) target = $region17
    $region16: #{tpu_custom_call.1} parent=1 // pred_region
      _
    $region17: #{tpu_custom_call.1} parent=1 // pred_fallthru
      _
    // Predicated region
    $region18: #{tpu_custom_call.1} parent=1 // pred_check
      _
    $region19: #{tpu_custom_call.1} parent=1 // pred_check_branch
      %24 = sbr.rel (0) target = $region21
    $region20: #{tpu_custom_call.1} parent=1 // pred_region
      _
    $region21: #{tpu_custom_call.1} parent=1 // pred_fallthru
      _
    // Predicated region
    $region22: #{tpu_custom_call.1} parent=1 // pred_check
      _
    $region23: #{tpu_custom_call.1} parent=1 // pred_check_branch
      %26 = sbr.rel (0) target = $region25
    $region24: #{tpu_custom_call.1} parent=1 // pred_region
      _
    $region25: #{tpu_custom_call.1} parent=1 // pred_fallthru
      _
    // Predicated region
    $region26: #{tpu_custom_call.1} parent=1 // pred_check
      _
    $region27: #{tpu_custom_call.1} parent=1 // pred_check_branch
      %28 = sbr.rel (0) target = $region29
    $region28: #{tpu_custom_call.1} parent=1 // pred_region
      _
    $region29: #{tpu_custom_call.1} parent=1 // pred_fallthru
      _
    // Predicated region
    $region30: #{tpu_custom_call.1} parent=1 // pred_check
      _
    $region31: #{tpu_custom_call.1} parent=1 // pred_check_branch
      %30 = sbr.rel (0) target = $region33
    $region32: #{tpu_custom_call.1} parent=1 // pred_region
      _
    $region33: #{tpu_custom_call.1} parent=1 // pred_fallthru
      _
    // Predicated region
    $region34: #{tpu_custom_call.1} parent=1 // pred_check
      _
    $region35: #{tpu_custom_call.1} parent=1 // pred_check_branch
      %32 = sbr.rel (0) target = $region37
    $region36: #{tpu_custom_call.1} parent=1 // pred_region
      _
    $region37: #{tpu_custom_call.1} parent=1 // pred_fallthru
      _
    %v34 = vld [vmem:[%s0] sm:$0xff]
    %v35 = vpack.c.bf16 %v34, %v34
    %v36 = vld [vmem:[%s1] sm:$0xf]
    %v37 = vld [vmem:[%s1 + $0x4] sm:$0xf]
    %v38 = vld [vmem:[%s1 + $0x8] sm:$0xf]
    %v39 = vld [vmem:[%s1 + $0xc] sm:$0xf]
    %v44 = vunpack.c.l.b16 %v36
    %v45 = vunpack.c.l.b16 %v37
    %v46 = vunpack.c.l.b16 %v38
    %v47 = vunpack.c.l.b16 %v39
    %v48 = vpack.c.b16 %v45, %v44
    %v49 = vpack.c.b16 %v47, %v46
    %vm52 = vcmask 261120
    %v54 = vsel %vm52, %v35, 0
    %56 = vmatpush.bf16.msra.mxu0 0
    %57 = vmatpush.bf16.msra.mxu0 0
    %58 = vmatpush.bf16.msra.mxu0 0
    %59 = vmatpush.bf16.msra.mxu0 0
    %60 = vmatpush.bf16.msra.mxu0 0
    %61 = vmatpush.bf16.msra.mxu0 0
    %62 = vmatpush.bf16.msra.mxu0 %v49
    %63 = vmatpush.bf16.msra.mxu0 %v48
    %64 = vmatmul.bf16.gmra.mxu0 %v54
    %v65 = vpop.f32.mrf.mxu0
    %v66 = vadd.f32 0.0, %v65
    %v67 = vpop.f32.mrf.mxu0
    %68 = vdwg.mxu0
    %v69 = vpack.c.bf16 %v66, %v66
    %v70 = vld [vmem:[%s2] sm:$0x1]
    %v72 = vpack.i.b16 %v70, %v70
    %v74 = vperm.slane %v72, 0
    %v75 = vunpack.c.l.bf16 %v69
    %v76 = vunpack.c.l.bf16 %v74
    %v77 = vadd.f32 %v75, %v76
    %v78 = vpack.c.bf16 %v77, %v77
    %v79 = vunpack.c.l.bf16 %v78
    %v80 = vtanh.pop %v79
    %v81 = vpack.c.bf16 %v80, %v80
    %v82 = vld [vmem:[%s3] sm:$0xf]
    %v83 = vld [vmem:[%s3 + $0x4] sm:$0xf]
    %v84 = vld [vmem:[%s3 + $0x8] sm:$0xf]
    %v85 = vld [vmem:[%s3 + $0xc] sm:$0xf]
    %v86 = vld [vmem:[%s3 + $0x10] sm:$0xf]
    %v87 = vld [vmem:[%s3 + $0x14] sm:$0xf]
    %v88 = vld [vmem:[%s3 + $0x18] sm:$0xf]
    %v89 = vld [vmem:[%s3 + $0x1c] sm:$0xf]
    %v98 = vunpack.c.l.b16 %v82
    %v99 = vunpack.c.l.b16 %v83
    %v100 = vunpack.c.l.b16 %v84
    %v101 = vunpack.c.l.b16 %v85
    %v102 = vunpack.c.l.b16 %v86
    %v103 = vunpack.c.l.b16 %v87
    %v104 = vunpack.c.l.b16 %v88
    %v105 = vunpack.c.l.b16 %v89
    %v106 = vpack.c.b16 %v99, %v98
    %v107 = vpack.c.b16 %v101, %v100
    %v108 = vpack.c.b16 %v103, %v102
    %v109 = vpack.c.b16 %v105, %v104
    %vm114 = vcmask 523264
    %v116 = vsel %vm114, %v81, 0
    %118 = vmatpush.bf16.msra.mxu0 0
    %119 = vmatpush.bf16.msra.mxu0 0
    %120 = vmatpush.bf16.msra.mxu0 0
    %121 = vmatpush.bf16.msra.mxu0 0
    %122 = vmatpush.bf16.msra.mxu0 %v109
    %123 = vmatpush.bf16.msra.mxu0 %v108
    %124 = vmatpush.bf16.msra.mxu0 %v107
    %125 = vmatpush.bf16.msra.mxu0 %v106
    %126 = vmatmul.bf16.gmra.mxu0 %v116
    %v127 = vpop.f32.mrf.mxu0
    %v128 = vadd.f32 0.0, %v127
    %v129 = vpop.f32.mrf.mxu0
    %130 = vdwg.mxu0
    %v131 = vpack.c.bf16 %v128, %v128
    %v132 = vld [vmem:[%s4] sm:$0x1]
    %v134 = vpack.i.b16 %v132, %v132
    %v136 = vperm.slane %v134, 0
    %v137 = vunpack.c.l.bf16 %v131
    %v138 = vunpack.c.l.bf16 %v136
    %v139 = vadd.f32 %v137, %v138
    %v140 = vpack.c.bf16 %v139, %v139
    %v141 = vunpack.c.l.bf16 %v140
    %v142 = vtanh.pop %v141
    %v143 = vpack.c.bf16 %v142, %v142
    %v144 = vld [vmem:[%s5] sm:$0xf]
    %v145 = vld [vmem:[%s5 + $0x4] sm:$0xf]
    %v146 = vld [vmem:[%s5 + $0x8] sm:$0xf]
    %v147 = vld [vmem:[%s5 + $0xc] sm:$0xf]
    %v152 = vunpack.c.l.b16 %v144
    %v153 = vunpack.c.l.b16 %v145
    %v154 = vunpack.c.l.b16 %v146
    %v155 = vunpack.c.l.b16 %v147
    %v156 = vpack.c.b16 %v153, %v152
    %v157 = vpack.c.b16 %v155, %v154
    %v161 = vsel %vm52, %v143, 0
    %163 = vmatpush.bf16.msra.mxu0 0
    %164 = vmatpush.bf16.msra.mxu0 0
    %165 = vmatpush.bf16.msra.mxu0 0
    %166 = vmatpush.bf16.msra.mxu0 0
    %167 = vmatpush.bf16.msra.mxu0 0
    %168 = vmatpush.bf16.msra.mxu0 0
    %169 = vmatpush.bf16.msra.mxu0 %v157
    %170 = vmatpush.bf16.msra.mxu0 %v156
    %171 = vmatmul.bf16.gmra.mxu0 %v161
    %v172 = vpop.f32.mrf.mxu0
    %v173 = vadd.f32 0.0, %v172
    %v174 = vpop.f32.mrf.mxu0
    %175 = vdwg.mxu0
    %v176 = vpack.c.bf16 %v173, %v173
    %v177 = vld [vmem:[%s6] sm:$0x1]
    %v179 = vpack.i.b16 %v177, %v177
    %v181 = vperm.slane %v179, 0
    %v182 = vunpack.c.l.bf16 %v176
    %v183 = vunpack.c.l.bf16 %v181
    %v184 = vadd.f32 %v182, %v183
    %v185 = vpack.c.bf16 %v184, %v184
    %v186 = vunpack.c.l.bf16 %v185
    %v187 = vtanh.pop %v186
    %v188 = vpack.c.bf16 %v187, %v187
    %v189 = vld [vmem:[%s7] sm:$0xf]
    %v190 = vld [vmem:[%s7 + $0x4] sm:$0xf]
    %v191 = vld [vmem:[%s8] sm:$0x1]
    %v193 = vperm.slane %v191, 0
    %v197 = vunpack.c.l.b16 %v189
    %v198 = vunpack.c.l.b16 %v190
    %v199 = vpack.c.b16 %v198, %v197
    %vm201 = vcmask 130048
    %v203 = vsel %vm201, %v188, 0
    %205 = vmatpush.bf16.msra.mxu0 0
    %206 = vmatpush.bf16.msra.mxu0 0
    %207 = vmatpush.bf16.msra.mxu0 0
    %208 = vmatpush.bf16.msra.mxu0 0
    %209 = vmatpush.bf16.msra.mxu0 0
    %210 = vmatpush.bf16.msra.mxu0 0
    %211 = vmatpush.bf16.msra.mxu0 0
    %212 = vmatpush.bf16.msra.mxu0 %v199
    %213 = vmatmul.bf16.gmra.mxu0 %v203
    %v214 = vpop.f32.mrf.mxu0
    %v215 = vadd.f32 %v193, %v214
    %v216 = vpop.f32.mrf.mxu0
    %217 = vdwg.mxu0
    %v218 = vpack.c.bf16 %v215, %v215
    %vm219 = vcmask 60416
    %220 = vst.msk [vmem:[#allocation2] sm:$0xf] %vm219, %v218
    // Predicated region
    $region38: #{tpu_custom_call.1} parent=1 // pred_check
      _
    $region39: #{tpu_custom_call.1} parent=1 // pred_check_branch
      %222 = sbr.rel (0) target = $region41
    $region40: #{tpu_custom_call.1} parent=1 // pred_region
      %224 = vsyncadd [#allocation3], 0
      %s226 = sshll.u32 [#allocation2], 4
      %s227 = int_to_ptr.vmem [resolvable:$true] %s226
      %s228 = sshll.u32 %s9, 4
      %s229 = int_to_ptr.hbm [resolvable:$true] %s228
      %231 = dma.vmem_to_hbm [thread:$0]  %s227, 64, %s229, [#allocation3]
    $region41: #{tpu_custom_call.1} parent=1 // pred_fallthru
      _
    // Predicated region
    $region42: #{tpu_custom_call.1} parent=1 // pred_check
      _
    $region43: #{tpu_custom_call.1} parent=1 // pred_check_branch
      %233 = sbr.rel (0) target = $region45
    $region44: #{tpu_custom_call.1} parent=1 // pred_region
      %235 = dma.done [#allocation3], 64
    $region45: #{tpu_custom_call.1} parent=1 // pred_fallthru
      _
    %236 = vsyncpa [#allocation3], 1

</llo_original>
